<compile_context>
chip_gen: v5e
topology: v5e:2x2
jax: 0.10.0
libtpu: 0.0.40
codegen_flags: <defaults>
</compile_context>

<pallas_src>
import math

import jax
import jax.numpy as jnp
from jax.experimental import pallas as pl
from jax.experimental.pallas import tpu as pltpu


_PAD_OUT = 128      # lane-dense output width; real logits live in lanes 0..2
_NEG_INF = -1e30    # bias padding -> padded lanes contribute exp(.) == 0
_SUB = 128          # in-kernel sub-block rows (bounds vreg/VMEM spill pressure)


def orientation_kernel(x_ref,
                       w1_ref, b1_ref,
                       w2_ref, b2_ref,
                       w3_ref, b3_ref,
                       w4_ref, b4_ref,
                       w5_ref, b5_ref,
                       o_ref):
    # TODO(synk): training-mode dropout (pltpu.prng_random_bits mask) not
    #             implemented; eval-mode dropout is the identity, reproduced here.
    n_sub = x_ref.shape[0] // _SUB

    # Loop over _SUB-row sub-blocks: bounds activation live ranges (no whole-tile
    # f32 intermediate kept live) without shrinking the Pallas batch tile.
    @pl.loop(0, n_sub)
    def _(s):
        r0 = pl.multiple_of(s * _SUB, _SUB)
        rows = pl.ds(r0, _SUB)

        # f32 -> bf16 cast in-kernel (VPU filler hidden under the input DMA).
        xb = x_ref[rows, :].astype(jnp.bfloat16)

        # linear1..4 + ReLU: bf16 operands on the MXU, f32 accumulate/elementwise.
        h = jnp.dot(xb, w1_ref[...], preferred_element_type=jnp.float32)
        h = jnp.maximum(h + b1_ref[...], 0.0)

        h = jnp.dot(h.astype(jnp.bfloat16), w2_ref[...],
                    preferred_element_type=jnp.float32)
        h = jnp.maximum(h + b2_ref[...], 0.0)

        h = jnp.dot(h.astype(jnp.bfloat16), w3_ref[...],
                    preferred_element_type=jnp.float32)
        h = jnp.maximum(h + b3_ref[...], 0.0)

        h = jnp.dot(h.astype(jnp.bfloat16), w4_ref[...],
                    preferred_element_type=jnp.float32)
        h = jnp.maximum(h + b4_ref[...], 0.0)

        # output linear (zero-padded to 128 lanes, bias padded with -1e30 so
        # padded lanes vanish under softmax) + softmax over the feature axis.
        logits = jnp.dot(h.astype(jnp.bfloat16), w5_ref[...],
                         preferred_element_type=jnp.float32) + b5_ref[...]
        m = jnp.max(logits, axis=-1, keepdims=True)
        e = jnp.exp(logits - m)
        inv = pl.reciprocal(jnp.sum(e, axis=-1, keepdims=True), approx=True)
        # bf16 store: halves the dominant HBM write stream vs an f32 output.
        o_ref[rows, :] = (e * inv).astype(o_ref.dtype)


def make_params(n_variables, key):
    """Deterministic init matching the PyTorch module's init scheme.

    kaiming_uniform_(nonlinearity='relu')  -> bound = sqrt(6 / fan_in)
    xavier_uniform_                        -> bound = sqrt(6 / (fan_in + fan_out))
    nn.Linear default bias init            -> U(-1/sqrt(fan_in), 1/sqrt(fan_in))
    Weights are stored transposed, shape (in, out), float32.
    """
    dims = [(n_variables, 128), (128, 128), (128, 64), (64, 32), (32, 3)]
    params = []
    keys = jax.random.split(key, 2 * len(dims))
    for i, (fan_in, fan_out) in enumerate(dims):
        wk, bk = keys[2 * i], keys[2 * i + 1]
        if i < 4:   # kaiming uniform, relu gain
            bound_w = math.sqrt(6.0 / fan_in)
        else:       # xavier uniform for the output layer
            bound_w = math.sqrt(6.0 / (fan_in + fan_out))
        w = jax.random.uniform(wk, (fan_in, fan_out), jnp.float32,
                               minval=-bound_w, maxval=bound_w)
        bound_b = 1.0 / math.sqrt(fan_in)
        b = jax.random.uniform(bk, (1, fan_out), jnp.float32,
                               minval=-bound_b, maxval=bound_b)
        params.append((w, b))
    return params


def _round_up(n, m):
    return ((n + m - 1) // m) * m


def _choose_tiling(batch, tile_b):
    """Pick (tile_b, b_pad, grid) with _SUB-row granularity.

    * keeps per-step tiles large (amortize ~0.35us/step overhead),
    * guarantees >= 2 grid steps when the batch allows it so the "parallel"
      axis shards across both v7x TensorCores,
    * re-balances tile size so ragged batches don't pay ~a full tile of padding.
    """
    b_min = _round_up(batch, _SUB)
    tile_b = max(_SUB, min(_round_up(tile_b, _SUB), b_min))
    if b_min >= 2 * _SUB and b_min <= tile_b:
        tile_b = _round_up((b_min + 1) // 2, _SUB)     # split for v7x megacore
    grid = -(-b_min // tile_b)
    tile_b = _round_up(-(-b_min // grid), _SUB)        # minimize tail padding
    return tile_b, tile_b * grid, grid


def orientation_forward(x, params, *, tile_b=1024):
    """x: (B, n_variables) f32  ->  (B, 3) f32 softmax probabilities."""
    B, nvar = x.shape
    tile_b, b_pad, grid_b = _choose_tiling(B, tile_b)

    # Only materialize a padded copy of x when the batch is ragged.
    x_p = x if b_pad == B else jnp.pad(x, ((0, b_pad - B), (0, 0)))

    # Pack weights (bf16, MXU operands) and biases (f32, keep -1e30 pad exact);
    # pad the output layer to 128 lanes so stores stay lane-dense (no vst.msk).
    flat = []
    for i, (w, b) in enumerate(params):
        if i == len(params) - 1:
            w = jnp.pad(w, ((0, 0), (0, _PAD_OUT - w.shape[1])))
            b = jnp.pad(b, ((0, 0), (0, _PAD_OUT - b.shape[1])),
                        constant_values=_NEG_INF)
        flat.append(w.astype(jnp.bfloat16))
        flat.append(b.astype(jnp.float32))

    def resident(a):  # weights/biases: one block, constant across the grid
        return pl.BlockSpec(a.shape, lambda i: (0, 0))

    in_specs = [pl.BlockSpec((tile_b, nvar), lambda i: (i, 0))]
    in_specs += [resident(a) for a in flat]

    # Advisory cost hint so XLA schedules surrounding ops sensibly.
    flops = 2 * b_pad * (nvar * 128 + 128 * 128 + 128 * 64 + 64 * 32
                         + 32 * _PAD_OUT)
    bytes_accessed = (b_pad * (nvar * 4 + _PAD_OUT * 2)
                      + sum(int(a.size) * a.dtype.itemsize for a in flat))
    cost = pl.CostEstimate(flops=flops,
                           transcendentals=b_pad * _PAD_OUT,
                           bytes_accessed=bytes_accessed)

    out = pl.pallas_call(
        orientation_kernel,
        grid=(grid_b,),
        out_shape=jax.ShapeDtypeStruct((b_pad, _PAD_OUT), jnp.bfloat16),
        in_specs=in_specs,
        out_specs=pl.BlockSpec((tile_b, _PAD_OUT), lambda i: (i, 0)),
        compiler_params=pltpu.CompilerParams(
            dimension_semantics=("parallel",),
            vmem_limit_bytes=32 * 1024 * 1024,   # also safe on v7x (64 MiB VMEM)
        ),
        cost_estimate=cost,
    )(x_p, *flat)

    return out[:B, :3].astype(jnp.float32)


def reference_forward_f32(x, params):
    h = x
    for i, (w, b) in enumerate(params):
        h = h @ w + b
        if i < len(params) - 1:
            h = jnp.maximum(h, 0.0)
    return jax.nn.softmax(h, axis=1)


def reference_forward_bf16(x, params):
    """Pure-JAX reference mimicking the kernel's mixed precision."""
    h = x.astype(jnp.bfloat16)
    for i, (w, b) in enumerate(params):
        h = jnp.dot(h, w.astype(jnp.bfloat16),
                    preferred_element_type=jnp.float32) + b
        if i < len(params) - 1:
            h = jnp.maximum(h, 0.0).astype(jnp.bfloat16)
    return jax.nn.softmax(h, axis=1)


if __name__ == "__main__":
    n_variables = 16
    key = jax.random.PRNGKey(0)
    pkey, xkey = jax.random.split(key)
    params = make_params(n_variables, pkey)

    # batch=8 hits the minimal single-tile path, batch=37 exercises ragged
    # padding, batch=300 exercises the multi-step (2-TC-shardable) grid.
    for batch in (8, 37, 300):
        x = jax.random.normal(jax.random.fold_in(xkey, batch),
                              (batch, n_variables), dtype=jnp.float32)

        out = jax.block_until_ready(orientation_forward(x, params))
        assert out.shape == (batch, 3)

        ref_mixed = reference_forward_bf16(x, params)
        ref_f32 = reference_forward_f32(x, params)

        assert bool(jnp.all(jnp.isfinite(out)))
        # check against a reference with matching (bf16-matmul) numerics;
        # tolerance covers the bf16 output quantization + approx reciprocal.
        assert jnp.allclose(out, ref_mixed, atol=1e-2, rtol=1e-2)
        # looser check against the pure-f32 PyTorch-equivalent math
        assert jnp.allclose(out, ref_f32, atol=5e-2, rtol=5e-2)
        # probabilities sum to ~1 (approx reciprocal + bf16 output)
        assert jnp.allclose(jnp.sum(out, axis=1), 1.0, atol=2e-2)

    print("KERNEL_OK")
</pallas_src>

<mosaic_0001>
module attributes {stable_mosaic.version = 11 : i64} {
  func.func @orientation_kernel(%arg0: i32, %arg1: memref<128x16xf32, #tpu.memory_space<vmem>>, %arg2: memref<16x128xbf16, #tpu.memory_space<vmem>>, %arg3: memref<1x128xf32, #tpu.memory_space<vmem>>, %arg4: memref<128x128xbf16, #tpu.memory_space<vmem>>, %arg5: memref<1x128xf32, #tpu.memory_space<vmem>>, %arg6: memref<128x64xbf16, #tpu.memory_space<vmem>>, %arg7: memref<1x64xf32, #tpu.memory_space<vmem>>, %arg8: memref<64x32xbf16, #tpu.memory_space<vmem>>, %arg9: memref<1x32xf32, #tpu.memory_space<vmem>>, %arg10: memref<32x128xbf16, #tpu.memory_space<vmem>>, %arg11: memref<1x128xf32, #tpu.memory_space<vmem>>, %arg12: memref<128x128xbf16, #tpu.memory_space<vmem>>) attributes {dimension_semantics = [#tpu.dimension_semantics<parallel>], iteration_bounds = array<i64: 1>, scalar_prefetch = 0 : i64, scratch_operands = 0 : i64, tpu.core_type = #tpu.core_type<tc>, window_params = [{transform_indices = @transform_0, window_bounds = array<i64: 128, 16>}, {pipeline_mode = #tpu.pipeline_mode<synchronous>, transform_indices = @transform_1, window_bounds = array<i64: 16, 128>}, {pipeline_mode = #tpu.pipeline_mode<synchronous>, transform_indices = @transform_2, window_bounds = array<i64: 1, 128>}, {pipeline_mode = #tpu.pipeline_mode<synchronous>, transform_indices = @transform_3, window_bounds = array<i64: 128, 128>}, {pipeline_mode = #tpu.pipeline_mode<synchronous>, transform_indices = @transform_4, window_bounds = array<i64: 1, 128>}, {pipeline_mode = #tpu.pipeline_mode<synchronous>, transform_indices = @transform_5, window_bounds = array<i64: 128, 64>}, {pipeline_mode = #tpu.pipeline_mode<synchronous>, transform_indices = @transform_6, window_bounds = array<i64: 1, 64>}, {pipeline_mode = #tpu.pipeline_mode<synchronous>, transform_indices = @transform_7, window_bounds = array<i64: 64, 32>}, {pipeline_mode = #tpu.pipeline_mode<synchronous>, transform_indices = @transform_8, window_bounds = array<i64: 1, 32>}, {pipeline_mode = #tpu.pipeline_mode<synchronous>, transform_indices = @transform_9, window_bounds = array<i64: 32, 128>}, {pipeline_mode = #tpu.pipeline_mode<synchronous>, transform_indices = @transform_10, window_bounds = array<i64: 1, 128>}, {transform_indices = @transform_11, window_bounds = array<i64: 128, 128>}]} {
    %c0_i32 = arith.constant 0 : i32
    %c1_i32 = arith.constant 1 : i32
    %0 = arith.muli %c0_i32, %c1_i32 : i32
    %c0_i32_0 = arith.constant 0 : i32
    %1 = arith.addi %c0_i32_0, %0 : i32
    %c128_i32 = arith.constant 128 : i32
    %2 = arith.muli %1, %c128_i32 : i32
    %3 = tpu.assume_multiple %2, 128 : i32
    %4 = arith.index_cast %3 : i32 to index
    %c0 = arith.constant 0 : index
    %5 = vector.load %arg1[%4, %c0] : memref<128x16xf32, #tpu.memory_space<vmem>>, vector<128x16xf32>
    %6 = arith.truncf %5 : vector<128x16xf32> to vector<128x16xbf16>
    %c0_1 = arith.constant 0 : index
    %c0_2 = arith.constant 0 : index
    %7 = vector.load %arg2[%c0_1, %c0_2] : memref<16x128xbf16, #tpu.memory_space<vmem>>, vector<16x128xbf16>
    %cst = arith.constant dense<0.000000e+00> : vector<128x128xf32>
    %8 = tpu.matmul %6, %7, %cst {dimension_numbers = #tpu.dot_dimension_numbers<[1], [0], [0], [1], [0, 0, 1, 1], [], []>} : vector<128x16xbf16>, vector<16x128xbf16>, vector<128x128xf32> -> vector<128x128xf32>
    %c0_3 = arith.constant 0 : index
    %c0_4 = arith.constant 0 : index
    %9 = vector.load %arg3[%c0_3, %c0_4] : memref<1x128xf32, #tpu.memory_space<vmem>>, vector<1x128xf32>
    %10 = vector.broadcast %9 : vector<1x128xf32> to vector<128x128xf32>
    %11 = arith.addf %8, %10 : vector<128x128xf32>
    %cst_5 = arith.constant 0.000000e+00 : f32
    %12 = vector.broadcast %cst_5 : f32 to vector<128x128xf32>
    %13 = arith.maximumf %11, %12 : vector<128x128xf32>
    %14 = arith.truncf %13 : vector<128x128xf32> to vector<128x128xbf16>
    %c0_6 = arith.constant 0 : index
    %c0_7 = arith.constant 0 : index
    %15 = vector.load %arg4[%c0_6, %c0_7] : memref<128x128xbf16, #tpu.memory_space<vmem>>, vector<128x128xbf16>
    %cst_8 = arith.constant dense<0.000000e+00> : vector<128x128xf32>
    %16 = tpu.matmul %14, %15, %cst_8 {dimension_numbers = #tpu.dot_dimension_numbers<[1], [0], [0], [1], [0, 0, 1, 1], [], []>} : vector<128x128xbf16>, vector<128x128xbf16>, vector<128x128xf32> -> vector<128x128xf32>
    %c0_9 = arith.constant 0 : index
    %c0_10 = arith.constant 0 : index
    %17 = vector.load %arg5[%c0_9, %c0_10] : memref<1x128xf32, #tpu.memory_space<vmem>>, vector<1x128xf32>
    %18 = vector.broadcast %17 : vector<1x128xf32> to vector<128x128xf32>
    %19 = arith.addf %16, %18 : vector<128x128xf32>
    %cst_11 = arith.constant 0.000000e+00 : f32
    %20 = vector.broadcast %cst_11 : f32 to vector<128x128xf32>
    %21 = arith.maximumf %19, %20 : vector<128x128xf32>
    %22 = arith.truncf %21 : vector<128x128xf32> to vector<128x128xbf16>
    %c0_12 = arith.constant 0 : index
    %c0_13 = arith.constant 0 : index
    %23 = vector.load %arg6[%c0_12, %c0_13] : memref<128x64xbf16, #tpu.memory_space<vmem>>, vector<128x64xbf16>
    %cst_14 = arith.constant dense<0.000000e+00> : vector<128x64xf32>
    %24 = tpu.matmul %22, %23, %cst_14 {dimension_numbers = #tpu.dot_dimension_numbers<[1], [0], [0], [1], [0, 0, 1, 1], [], []>} : vector<128x128xbf16>, vector<128x64xbf16>, vector<128x64xf32> -> vector<128x64xf32>
    %c0_15 = arith.constant 0 : index
    %c0_16 = arith.constant 0 : index
    %25 = vector.load %arg7[%c0_15, %c0_16] : memref<1x64xf32, #tpu.memory_space<vmem>>, vector<1x64xf32>
    %26 = vector.broadcast %25 : vector<1x64xf32> to vector<128x64xf32>
    %27 = arith.addf %24, %26 : vector<128x64xf32>
    %cst_17 = arith.constant 0.000000e+00 : f32
    %28 = vector.broadcast %cst_17 : f32 to vector<128x64xf32>
    %29 = arith.maximumf %27, %28 : vector<128x64xf32>
    %30 = arith.truncf %29 : vector<128x64xf32> to vector<128x64xbf16>
    %c0_18 = arith.constant 0 : index
    %c0_19 = arith.constant 0 : index
    %31 = vector.load %arg8[%c0_18, %c0_19] : memref<64x32xbf16, #tpu.memory_space<vmem>>, vector<64x32xbf16>
    %cst_20 = arith.constant dense<0.000000e+00> : vector<128x32xf32>
    %32 = tpu.matmul %30, %31, %cst_20 {dimension_numbers = #tpu.dot_dimension_numbers<[1], [0], [0], [1], [0, 0, 1, 1], [], []>} : vector<128x64xbf16>, vector<64x32xbf16>, vector<128x32xf32> -> vector<128x32xf32>
    %c0_21 = arith.constant 0 : index
    %c0_22 = arith.constant 0 : index
    %33 = vector.load %arg9[%c0_21, %c0_22] : memref<1x32xf32, #tpu.memory_space<vmem>>, vector<1x32xf32>
    %34 = vector.broadcast %33 : vector<1x32xf32> to vector<128x32xf32>
    %35 = arith.addf %32, %34 : vector<128x32xf32>
    %cst_23 = arith.constant 0.000000e+00 : f32
    %36 = vector.broadcast %cst_23 : f32 to vector<128x32xf32>
    %37 = arith.maximumf %35, %36 : vector<128x32xf32>
    %38 = arith.truncf %37 : vector<128x32xf32> to vector<128x32xbf16>
    %c0_24 = arith.constant 0 : index
    %c0_25 = arith.constant 0 : index
    %39 = vector.load %arg10[%c0_24, %c0_25] : memref<32x128xbf16, #tpu.memory_space<vmem>>, vector<32x128xbf16>
    %cst_26 = arith.constant dense<0.000000e+00> : vector<128x128xf32>
    %40 = tpu.matmul %38, %39, %cst_26 {dimension_numbers = #tpu.dot_dimension_numbers<[1], [0], [0], [1], [0, 0, 1, 1], [], []>} : vector<128x32xbf16>, vector<32x128xbf16>, vector<128x128xf32> -> vector<128x128xf32>
    %c0_27 = arith.constant 0 : index
    %c0_28 = arith.constant 0 : index
    %41 = vector.load %arg11[%c0_27, %c0_28] : memref<1x128xf32, #tpu.memory_space<vmem>>, vector<1x128xf32>
    %42 = vector.broadcast %41 : vector<1x128xf32> to vector<128x128xf32>
    %43 = arith.addf %40, %42 : vector<128x128xf32>
    %cst_29 = arith.constant dense<0xFF800000> : vector<128xf32>
    %44 = vector.multi_reduction <maximumf>, %43, %cst_29 [1] : vector<128x128xf32> to vector<128xf32>
    %45 = vector.shape_cast %44 : vector<128xf32> to vector<128x1xf32>
    %46 = vector.broadcast %45 : vector<128x1xf32> to vector<128x128xf32>
    %47 = arith.subf %43, %46 : vector<128x128xf32>
    %48 = math.exp %47 : vector<128x128xf32>
    %cst_30 = arith.constant dense<0.000000e+00> : vector<128xf32>
    %49 = vector.multi_reduction <add>, %48, %cst_30 [1] : vector<128x128xf32> to vector<128xf32>
    %50 = vector.shape_cast %49 : vector<128xf32> to vector<128x1xf32>
    %51 = tpu.reciprocal %50 {approx = true} : vector<128x1xf32> -> vector<128x1xf32>
    %52 = vector.broadcast %51 : vector<128x1xf32> to vector<128x128xf32>
    %53 = arith.mulf %48, %52 : vector<128x128xf32>
    %54 = arith.truncf %53 : vector<128x128xf32> to vector<128x128xbf16>
    %55 = arith.index_cast %3 : i32 to index
    %c0_31 = arith.constant 0 : index
    %56 = vector.load %arg12[%55, %c0_31] : memref<128x128xbf16, #tpu.memory_space<vmem>>, vector<128x128xbf16>
    tpu.vector_store %arg12[%55, %c0_31], %54 {strides = array<i32>} : memref<128x128xbf16, #tpu.memory_space<vmem>>, vector<128x128xbf16>,
    %c1_i32_32 = arith.constant 1 : i32
    return
  }
  func.func @transform_0(%arg0: i32) -> (i32, i32) {
    %c0_i32 = arith.constant 0 : i32
    %c0_i32_0 = arith.constant 0 : i32
    return %arg0, %c0_i32 : i32, i32
  }
  func.func @transform_1(%arg0: i32) -> (i32, i32) {
    %c0_i32 = arith.constant 0 : i32
    %c0_i32_0 = arith.constant 0 : i32
    %c0_i32_1 = arith.constant 0 : i32
    return %c0_i32, %c0_i32_0 : i32, i32
  }
  func.func @transform_2(%arg0: i32) -> (i32, i32) {
    %c0_i32 = arith.constant 0 : i32
    %c0_i32_0 = arith.constant 0 : i32
    %c0_i32_1 = arith.constant 0 : i32
    return %c0_i32, %c0_i32_0 : i32, i32
  }
  func.func @transform_3(%arg0: i32) -> (i32, i32) {
    %c0_i32 = arith.constant 0 : i32
    %c0_i32_0 = arith.constant 0 : i32
    %c0_i32_1 = arith.constant 0 : i32
    return %c0_i32, %c0_i32_0 : i32, i32
  }
  func.func @transform_4(%arg0: i32) -> (i32, i32) {
    %c0_i32 = arith.constant 0 : i32
    %c0_i32_0 = arith.constant 0 : i32
    %c0_i32_1 = arith.constant 0 : i32
    return %c0_i32, %c0_i32_0 : i32, i32
  }
  func.func @transform_5(%arg0: i32) -> (i32, i32) {
    %c0_i32 = arith.constant 0 : i32
    %c0_i32_0 = arith.constant 0 : i32
    %c0_i32_1 = arith.constant 0 : i32
    return %c0_i32, %c0_i32_0 : i32, i32
  }
  func.func @transform_6(%arg0: i32) -> (i32, i32) {
    %c0_i32 = arith.constant 0 : i32
    %c0_i32_0 = arith.constant 0 : i32
    %c0_i32_1 = arith.constant 0 : i32
    return %c0_i32, %c0_i32_0 : i32, i32
  }
  func.func @transform_7(%arg0: i32) -> (i32, i32) {
    %c0_i32 = arith.constant 0 : i32
    %c0_i32_0 = arith.constant 0 : i32
    %c0_i32_1 = arith.constant 0 : i32
    return %c0_i32, %c0_i32_0 : i32, i32
  }
  func.func @transform_8(%arg0: i32) -> (i32, i32) {
    %c0_i32 = arith.constant 0 : i32
    %c0_i32_0 = arith.constant 0 : i32
    %c0_i32_1 = arith.constant 0 : i32
    return %c0_i32, %c0_i32_0 : i32, i32
  }
  func.func @transform_9(%arg0: i32) -> (i32, i32) {
    %c0_i32 = arith.constant 0 : i32
    %c0_i32_0 = arith.constant 0 : i32
    %c0_i32_1 = arith.constant 0 : i32
    return %c0_i32, %c0_i32_0 : i32, i32
  }
  func.func @transform_10(%arg0: i32) -> (i32, i32) {
    %c0_i32 = arith.constant 0 : i32
    %c0_i32_0 = arith.constant 0 : i32
    %c0_i32_1 = arith.constant 0 : i32
    return %c0_i32, %c0_i32_0 : i32, i32
  }
  func.func @transform_11(%arg0: i32) -> (i32, i32) {
    %c0_i32 = arith.constant 0 : i32
    %c0_i32_0 = arith.constant 0 : i32
    return %arg0, %c0_i32 : i32, i32
  }
}

</mosaic_0001>

<llo_original>
// kernel: tpu_custom_call.1
$region0: #{tpu_custom_call.1}
  #allocation0 [shape = 'u32[]', space=smem, size = 0x4, offset = 0x4, fixed_abs, tag = 'smem constant byte address 0x4 - core index']
  #allocation1 [shape = 'u32[72,128]{1,0:T(1,128)}', space=vmem, size = 0x9000, scoped, tag = 'internal scratch']
  %s0 = inlined_call_operand.vmem [shape: f32[128,16], index: 0, kind: input, shape index: {}]
  %s1 = inlined_call_operand.vmem [shape: bf16[16,128], index: 1, kind: input, shape index: {}]
  %s2 = inlined_call_operand.vmem [shape: f32[1,128], index: 2, kind: input, shape index: {}]
  %s3 = inlined_call_operand.vmem [shape: bf16[128,128], index: 3, kind: input, shape index: {}]
  %s4 = inlined_call_operand.vmem [shape: f32[1,128], index: 4, kind: input, shape index: {}]
  %s5 = inlined_call_operand.vmem [shape: bf16[128,64], index: 5, kind: input, shape index: {}]
  %s6 = inlined_call_operand.vmem [shape: f32[1,64], index: 6, kind: input, shape index: {}]
  %s7 = inlined_call_operand.vmem [shape: bf16[64,32], index: 7, kind: input, shape index: {}]
  %s8 = inlined_call_operand.vmem [shape: f32[1,32], index: 8, kind: input, shape index: {}]
  %s9 = inlined_call_operand.vmem [shape: bf16[32,128], index: 9, kind: input, shape index: {}]
  %s10 = inlined_call_operand.vmem [shape: f32[1,128], index: 10, kind: input, shape index: {}]
  %s11 = inlined_call_operand.hbm [shape: bf16[128,128], index: 11, kind: output, shape index: {}]
  %s12 = sld [smem:[#allocation0]]
  $region54: #{tpu_custom_call.1} parent=0
    _
  %s14 = ssub.s32 1, %s12
  %s15 = scalar_select 0, %s14, %s12
  $region1: #{tpu_custom_call.1} parent=0
    #allocation2 [shape = 'u8[32768]{0}', space=vmem, size = 0x8000, scoped, tag = 'output window, operand 0, single buffered']
    #allocation3 [shape = 's32[1]{0}', space=sflag, size = 0x4, scoped, tag = 'scoped memory for tpu_custom_call.1']
    %16 = vsyncpa [#allocation3], 0
    // Predicated region
    $region2: #{tpu_custom_call.1} parent=1 // pred_check
      _
    $region3: #{tpu_custom_call.1} parent=1 // pred_check_branch
      %18 = sbr.rel (0) target = $region5
    $region4: #{tpu_custom_call.1} parent=1 // pred_region
      _
    $region5: #{tpu_custom_call.1} parent=1 // pred_fallthru
      _
    // Predicated region
    $region6: #{tpu_custom_call.1} parent=1 // pred_check
      _
    $region7: #{tpu_custom_call.1} parent=1 // pred_check_branch
      %20 = sbr.rel (0) target = $region9
    $region8: #{tpu_custom_call.1} parent=1 // pred_region
      _
    $region9: #{tpu_custom_call.1} parent=1 // pred_fallthru
      _
    // Predicated region
    $region10: #{tpu_custom_call.1} parent=1 // pred_check
      _
    $region11: #{tpu_custom_call.1} parent=1 // pred_check_branch
      %22 = sbr.rel (0) target = $region13
    $region12: #{tpu_custom_call.1} parent=1 // pred_region
      _
    $region13: #{tpu_custom_call.1} parent=1 // pred_fallthru
      _
    // Predicated region
    $region14: #{tpu_custom_call.1} parent=1 // pred_check
      _
    $region15: #{tpu_custom_call.1} parent=1 // pred_check_branch
      %24 = sbr.rel (0) target = $region17
    $region16: #{tpu_custom_call.1} parent=1 // pred_region
      _
    $region17: #{tpu_custom_call.1} parent=1 // pred_fallthru
      _
    // Predicated region
    $region18: #{tpu_custom_call.1} parent=1 // pred_check
      _
    $region19: #{tpu_custom_call.1} parent=1 // pred_check_branch
      %26 = sbr.rel (0) target = $region21
    $region20: #{tpu_custom_call.1} parent=1 // pred_region
      _
    $region21: #{tpu_custom_call.1} parent=1 // pred_fallthru
      _
    // Predicated region
    $region22: #{tpu_custom_call.1} parent=1 // pred_check
      _
    $region23: #{tpu_custom_call.1} parent=1 // pred_check_branch
      %28 = sbr.rel (0) target = $region25
    $region24: #{tpu_custom_call.1} parent=1 // pred_region
      _
    $region25: #{tpu_custom_call.1} parent=1 // pred_fallthru
      _
    // Predicated region
    $region26: #{tpu_custom_call.1} parent=1 // pred_check
      _
    $region27: #{tpu_custom_call.1} parent=1 // pred_check_branch
      %30 = sbr.rel (0) target = $region29
    $region28: #{tpu_custom_call.1} parent=1 // pred_region
      _
    $region29: #{tpu_custom_call.1} parent=1 // pred_fallthru
      _
    // Predicated region
    $region30: #{tpu_custom_call.1} parent=1 // pred_check
      _
    $region31: #{tpu_custom_call.1} parent=1 // pred_check_branch
      %32 = sbr.rel (0) target = $region33
    $region32: #{tpu_custom_call.1} parent=1 // pred_region
      _
    $region33: #{tpu_custom_call.1} parent=1 // pred_fallthru
      _
    // Predicated region
    $region34: #{tpu_custom_call.1} parent=1 // pred_check
      _
    $region35: #{tpu_custom_call.1} parent=1 // pred_check_branch
      %34 = sbr.rel (0) target = $region37
    $region36: #{tpu_custom_call.1} parent=1 // pred_region
      _
    $region37: #{tpu_custom_call.1} parent=1 // pred_fallthru
      _
    // Predicated region
    $region38: #{tpu_custom_call.1} parent=1 // pred_check
      _
    $region39: #{tpu_custom_call.1} parent=1 // pred_check_branch
      %36 = sbr.rel (0) target = $region41
    $region40: #{tpu_custom_call.1} parent=1 // pred_region
      _
    $region41: #{tpu_custom_call.1} parent=1 // pred_fallthru
      _
    // Predicated region
    $region42: #{tpu_custom_call.1} parent=1 // pred_check
      _
    $region43: #{tpu_custom_call.1} parent=1 // pred_check_branch
      %38 = sbr.rel (0) target = $region45
    $region44: #{tpu_custom_call.1} parent=1 // pred_region
      _
    $region45: #{tpu_custom_call.1} parent=1 // pred_fallthru
      _
    %v40 = vld [vmem:[%s0] sm:$0xff]
    %v41 = vld [vmem:[%s0 + $0x8] sm:$0xff]
    %v42 = vld [vmem:[%s0 + $0x10] sm:$0xff]
    %v43 = vld [vmem:[%s0 + $0x18] sm:$0xff]
    %v44 = vld [vmem:[%s0 + $0x20] sm:$0xff]
    %v45 = vld [vmem:[%s0 + $0x28] sm:$0xff]
    %v46 = vld [vmem:[%s0 + $0x30] sm:$0xff]
    %v47 = vld [vmem:[%s0 + $0x38] sm:$0xff]
    %v48 = vld [vmem:[%s0 + $0x40] sm:$0xff]
    %v49 = vld [vmem:[%s0 + $0x48] sm:$0xff]
    %v50 = vld [vmem:[%s0 + $0x50] sm:$0xff]
    %v51 = vld [vmem:[%s0 + $0x58] sm:$0xff]
    %v52 = vld [vmem:[%s0 + $0x60] sm:$0xff]
    %v53 = vld [vmem:[%s0 + $0x68] sm:$0xff]
    %v54 = vld [vmem:[%s0 + $0x70] sm:$0xff]
    %v55 = vld [vmem:[%s0 + $0x78] sm:$0xff]
    %v56 = vpack.c.bf16 %v41, %v40
    %v57 = vpack.c.bf16 %v43, %v42
    %v58 = vpack.c.bf16 %v45, %v44
    %v59 = vpack.c.bf16 %v47, %v46
    %v60 = vpack.c.bf16 %v49, %v48
    %v61 = vpack.c.bf16 %v51, %v50
    %v62 = vpack.c.bf16 %v53, %v52
    %v63 = vpack.c.bf16 %v55, %v54
    %v64 = vld [vmem:[%s1] sm:$0xf]
    %v65 = vld [vmem:[%s1 + $0x4] sm:$0xf]
    %v66 = vld [vmem:[%s2] sm:$0x1]
    %v68 = vperm.slane %v66, 0
    %v72 = vunpack.c.l.b16 %v64
    %v73 = vunpack.c.l.b16 %v65
    %v74 = vpack.c.b16 %v73, %v72
    %vm76 = vcmask 130048
    %v78 = vsel %vm76, %v56, 0
    %v81 = vsel %vm76, %v57, 0
    %v84 = vsel %vm76, %v58, 0
    %v87 = vsel %vm76, %v59, 0
    %v90 = vsel %vm76, %v60, 0
    %v93 = vsel %vm76, %v61, 0
    %v96 = vsel %vm76, %v62, 0
    %v99 = vsel %vm76, %v63, 0
    %101 = vmatpush.bf16.msra.mxu0 0
    %102 = vmatpush.bf16.msra.mxu0 0
    %103 = vmatpush.bf16.msra.mxu0 0
    %104 = vmatpush.bf16.msra.mxu0 0
    %105 = vmatpush.bf16.msra.mxu0 0
    %106 = vmatpush.bf16.msra.mxu0 0
    %107 = vmatpush.bf16.msra.mxu0 0
    %108 = vmatpush.bf16.msra.mxu0 %v74
    %109 = vmatmul.bf16.gmra.mxu0 %v78
    %v110 = vpop.f32.mrf.mxu0
    %v111 = vadd.f32 %v68, %v110
    %v112 = vpop.f32.mrf.mxu0
    %v113 = vadd.f32 %v68, %v112
    %114 = vmatmul.bf16.gmra.mxu0 %v81
    %v115 = vpop.f32.mrf.mxu0
    %v116 = vadd.f32 %v68, %v115
    %v117 = vpop.f32.mrf.mxu0
    %v118 = vadd.f32 %v68, %v117
    %119 = vmatmul.bf16.gmra.mxu0 %v84
    %v120 = vpop.f32.mrf.mxu0
    %v121 = vadd.f32 %v68, %v120
    %v122 = vpop.f32.mrf.mxu0
    %v123 = vadd.f32 %v68, %v122
    %124 = vmatmul.bf16.gmra.mxu0 %v87
    %v125 = vpop.f32.mrf.mxu0
    %v126 = vadd.f32 %v68, %v125
    %v127 = vpop.f32.mrf.mxu0
    %v128 = vadd.f32 %v68, %v127
    %129 = vmatmul.bf16.gmra.mxu0 %v90
    %v130 = vpop.f32.mrf.mxu0
    %v131 = vadd.f32 %v68, %v130
    %v132 = vpop.f32.mrf.mxu0
    %v133 = vadd.f32 %v68, %v132
    %134 = vmatmul.bf16.gmra.mxu0 %v93
    %v135 = vpop.f32.mrf.mxu0
    %v136 = vadd.f32 %v68, %v135
    %v137 = vpop.f32.mrf.mxu0
    %v138 = vadd.f32 %v68, %v137
    %139 = vmatmul.bf16.gmra.mxu0 %v96
    %v140 = vpop.f32.mrf.mxu0
    %v141 = vadd.f32 %v68, %v140
    %v142 = vpop.f32.mrf.mxu0
    %v143 = vadd.f32 %v68, %v142
    %144 = vmatmul.bf16.gmra.mxu0 %v99
    %v145 = vpop.f32.mrf.mxu0
    %v146 = vadd.f32 %v68, %v145
    %v147 = vpop.f32.mrf.mxu0
    %v148 = vadd.f32 %v68, %v147
    %149 = vdwg.mxu0
    %v150 = vmax.f32 %v111, 0.0
    %v151 = vmax.f32 %v113, 0.0
    %v152 = vmax.f32 %v116, 0.0
    %v153 = vmax.f32 %v118, 0.0
    %v154 = vmax.f32 %v121, 0.0
    %v155 = vmax.f32 %v123, 0.0
    %v156 = vmax.f32 %v126, 0.0
    %v157 = vmax.f32 %v128, 0.0
    %v158 = vmax.f32 %v131, 0.0
    %v159 = vmax.f32 %v133, 0.0
    %v160 = vmax.f32 %v136, 0.0
    %v161 = vmax.f32 %v138, 0.0
    %v162 = vmax.f32 %v141, 0.0
    %v163 = vmax.f32 %v143, 0.0
    %v164 = vmax.f32 %v146, 0.0
    %v165 = vmax.f32 %v148, 0.0
    %v166 = vpack.c.bf16 %v151, %v150
    %v167 = vpack.c.bf16 %v153, %v152
    %v168 = vpack.c.bf16 %v155, %v154
    %v169 = vpack.c.bf16 %v157, %v156
    %v170 = vpack.c.bf16 %v159, %v158
    %v171 = vpack.c.bf16 %v161, %v160
    %v172 = vpack.c.bf16 %v163, %v162
    %v173 = vpack.c.bf16 %v165, %v164
    %v174 = vld [vmem:[%s3] sm:$0xf]
    %v175 = vld [vmem:[%s3 + $0x4] sm:$0xf]
    %v176 = vld [vmem:[%s3 + $0x8] sm:$0xf]
    %v177 = vld [vmem:[%s3 + $0xc] sm:$0xf]
    %v178 = vld [vmem:[%s3 + $0x10] sm:$0xf]
    %v179 = vld [vmem:[%s3 + $0x14] sm:$0xf]
    %v180 = vld [vmem:[%s3 + $0x18] sm:$0xf]
    %v181 = vld [vmem:[%s3 + $0x1c] sm:$0xf]
    %v182 = vld [vmem:[%s3 + $0x20] sm:$0xf]
    %v183 = vld [vmem:[%s3 + $0x24] sm:$0xf]
    %v184 = vld [vmem:[%s3 + $0x28] sm:$0xf]
    %v185 = vld [vmem:[%s3 + $0x2c] sm:$0xf]
    %v186 = vld [vmem:[%s3 + $0x30] sm:$0xf]
    %v187 = vld [vmem:[%s3 + $0x34] sm:$0xf]
    %v188 = vld [vmem:[%s3 + $0x38] sm:$0xf]
    %v189 = vld [vmem:[%s3 + $0x3c] sm:$0xf]
    %v190 = vld [vmem:[%s4] sm:$0x1]
    %v192 = vperm.slane %v190, 0
    %v210 = vunpack.c.l.b16 %v174
    %v211 = vunpack.c.l.b16 %v175
    %v212 = vunpack.c.l.b16 %v176
    %v213 = vunpack.c.l.b16 %v177
    %v214 = vunpack.c.l.b16 %v178
    %v215 = vunpack.c.l.b16 %v179
    %v216 = vunpack.c.l.b16 %v180
    %v217 = vunpack.c.l.b16 %v181
    %v218 = vunpack.c.l.b16 %v182
    %v219 = vunpack.c.l.b16 %v183
    %v220 = vunpack.c.l.b16 %v184
    %v221 = vunpack.c.l.b16 %v185
    %v222 = vunpack.c.l.b16 %v186
    %v223 = vunpack.c.l.b16 %v187
    %v224 = vunpack.c.l.b16 %v188
    %v225 = vunpack.c.l.b16 %v189
    %v226 = vpack.c.b16 %v211, %v210
    %v227 = vpack.c.b16 %v213, %v212
    %v228 = vpack.c.b16 %v215, %v214
    %v229 = vpack.c.b16 %v217, %v216
    %v230 = vpack.c.b16 %v219, %v218
    %v231 = vpack.c.b16 %v221, %v220
    %v232 = vpack.c.b16 %v223, %v222
    %v233 = vpack.c.b16 %v225, %v224
    %242 = vmatpush.bf16.msra.mxu0 %v233
    %243 = vmatpush.bf16.msra.mxu0 %v232
    %244 = vmatpush.bf16.msra.mxu0 %v231
    %245 = vmatpush.bf16.msra.mxu0 %v230
    %246 = vmatpush.bf16.msra.mxu0 %v229
    %247 = vmatpush.bf16.msra.mxu0 %v228
    %248 = vmatpush.bf16.msra.mxu0 %v227
    %249 = vmatpush.bf16.msra.mxu0 %v226
    %250 = vmatmul.bf16.gmra.mxu0 %v166
    %v251 = vpop.f32.mrf.mxu0
    %v252 = vadd.f32 %v192, %v251
    %v253 = vpop.f32.mrf.mxu0
    %v254 = vadd.f32 %v192, %v253
    %255 = vmatmul.bf16.gmra.mxu0 %v167
    %v256 = vpop.f32.mrf.mxu0
    %v257 = vadd.f32 %v192, %v256
    %v258 = vpop.f32.mrf.mxu0
    %v259 = vadd.f32 %v192, %v258
    %260 = vmatmul.bf16.gmra.mxu0 %v168
    %v261 = vpop.f32.mrf.mxu0
    %v262 = vadd.f32 %v192, %v261
    %v263 = vpop.f32.mrf.mxu0
    %v264 = vadd.f32 %v192, %v263
    %265 = vmatmul.bf16.gmra.mxu0 %v169
    %v266 = vpop.f32.mrf.mxu0
    %v267 = vadd.f32 %v192, %v266
    %v268 = vpop.f32.mrf.mxu0
    %v269 = vadd.f32 %v192, %v268
    %270 = vmatmul.bf16.gmra.mxu0 %v170
    %v271 = vpop.f32.mrf.mxu0
    %v272 = vadd.f32 %v192, %v271
    %v273 = vpop.f32.mrf.mxu0
    %v274 = vadd.f32 %v192, %v273
    %275 = vmatmul.bf16.gmra.mxu0 %v171
    %v276 = vpop.f32.mrf.mxu0
    %v277 = vadd.f32 %v192, %v276
    %v278 = vpop.f32.mrf.mxu0
    %v279 = vadd.f32 %v192, %v278
    %280 = vmatmul.bf16.gmra.mxu0 %v172
    %v281 = vpop.f32.mrf.mxu0
    %v282 = vadd.f32 %v192, %v281
    %v283 = vpop.f32.mrf.mxu0
    %v284 = vadd.f32 %v192, %v283
    %285 = vmatmul.bf16.gmra.mxu0 %v173
    %v286 = vpop.f32.mrf.mxu0
    %v287 = vadd.f32 %v192, %v286
    %v288 = vpop.f32.mrf.mxu0
    %v289 = vadd.f32 %v192, %v288
    %290 = vdwg.mxu0
    %v291 = vmax.f32 %v252, 0.0
    %v292 = vmax.f32 %v254, 0.0
    %v293 = vmax.f32 %v257, 0.0
    %v294 = vmax.f32 %v259, 0.0
    %v295 = vmax.f32 %v262, 0.0
    %v296 = vmax.f32 %v264, 0.0
    %v297 = vmax.f32 %v267, 0.0
    %v298 = vmax.f32 %v269, 0.0
    %v299 = vmax.f32 %v272, 0.0
    %v300 = vmax.f32 %v274, 0.0
    %v301 = vmax.f32 %v277, 0.0
    %v302 = vmax.f32 %v279, 0.0
    %v303 = vmax.f32 %v282, 0.0
    %v304 = vmax.f32 %v284, 0.0
    %v305 = vmax.f32 %v287, 0.0
    %v306 = vmax.f32 %v289, 0.0
    %v307 = vpack.c.bf16 %v292, %v291
    %v308 = vpack.c.bf16 %v294, %v293
    %v309 = vpack.c.bf16 %v296, %v295
    %v310 = vpack.c.bf16 %v298, %v297
    %v311 = vpack.c.bf16 %v300, %v299
    %v312 = vpack.c.bf16 %v302, %v301
    %v313 = vpack.c.bf16 %v304, %v303
    %v314 = vpack.c.bf16 %v306, %v305
    %v315 = vld [vmem:[%s5] sm:$0xf]
    %v316 = vld [vmem:[%s5 + $0x4] sm:$0xf]
    %v317 = vld [vmem:[%s5 + $0x8] sm:$0xf]
    %v318 = vld [vmem:[%s5 + $0xc] sm:$0xf]
    %v319 = vld [vmem:[%s5 + $0x10] sm:$0xf]
    %v320 = vld [vmem:[%s5 + $0x14] sm:$0xf]
    %v321 = vld [vmem:[%s5 + $0x18] sm:$0xf]
    %v322 = vld [vmem:[%s5 + $0x1c] sm:$0xf]
    %v323 = vld [vmem:[%s5 + $0x20] sm:$0xf]
    %v324 = vld [vmem:[%s5 + $0x24] sm:$0xf]
    %v325 = vld [vmem:[%s5 + $0x28] sm:$0xf]
    %v326 = vld [vmem:[%s5 + $0x2c] sm:$0xf]
    %v327 = vld [vmem:[%s5 + $0x30] sm:$0xf]
    %v328 = vld [vmem:[%s5 + $0x34] sm:$0xf]
    %v329 = vld [vmem:[%s5 + $0x38] sm:$0xf]
    %v330 = vld [vmem:[%s5 + $0x3c] sm:$0xf]
    %v331 = vld [vmem:[%s6] sm:$0x1]
    %v333 = vperm.slane %v331, 0
    %v351 = vunpack.c.l.b16 %v315
    %v352 = vunpack.c.l.b16 %v316
    %v353 = vunpack.c.l.b16 %v317
    %v354 = vunpack.c.l.b16 %v318
    %v355 = vunpack.c.l.b16 %v319
    %v356 = vunpack.c.l.b16 %v320
    %v357 = vunpack.c.l.b16 %v321
    %v358 = vunpack.c.l.b16 %v322
    %v359 = vunpack.c.l.b16 %v323
    %v360 = vunpack.c.l.b16 %v324
    %v361 = vunpack.c.l.b16 %v325
    %v362 = vunpack.c.l.b16 %v326
    %v363 = vunpack.c.l.b16 %v327
    %v364 = vunpack.c.l.b16 %v328
    %v365 = vunpack.c.l.b16 %v329
    %v366 = vunpack.c.l.b16 %v330
    %v367 = vpack.c.b16 %v352, %v351
    %v368 = vpack.c.b16 %v354, %v353
    %v369 = vpack.c.b16 %v356, %v355
    %v370 = vpack.c.b16 %v358, %v357
    %v371 = vpack.c.b16 %v360, %v359
    %v372 = vpack.c.b16 %v362, %v361
    %v373 = vpack.c.b16 %v364, %v363
    %v374 = vpack.c.b16 %v366, %v365
    %383 = vmatpush.bf16.msra.mxu0 %v374
    %384 = vmatpush.bf16.msra.mxu0 %v373
    %385 = vmatpush.bf16.msra.mxu0 %v372
    %386 = vmatpush.bf16.msra.mxu0 %v371
    %387 = vmatpush.bf16.msra.mxu0 %v370
    %388 = vmatpush.bf16.msra.mxu0 %v369
    %389 = vmatpush.bf16.msra.mxu0 %v368
    %390 = vmatpush.bf16.msra.mxu0 %v367
    %391 = vmatmul.bf16.gmra.mxu0 %v307
    %v392 = vpop.f32.mrf.mxu0
    %v393 = vadd.f32 %v333, %v392
    %v394 = vpop.f32.mrf.mxu0
    %v395 = vadd.f32 %v333, %v394
    %396 = vmatmul.bf16.gmra.mxu0 %v308
    %v397 = vpop.f32.mrf.mxu0
    %v398 = vadd.f32 %v333, %v397
    %v399 = vpop.f32.mrf.mxu0
    %v400 = vadd.f32 %v333, %v399
    %401 = vmatmul.bf16.gmra.mxu0 %v309
    %v402 = vpop.f32.mrf.mxu0
    %v403 = vadd.f32 %v333, %v402
    %v404 = vpop.f32.mrf.mxu0
    %v405 = vadd.f32 %v333, %v404
    %406 = vmatmul.bf16.gmra.mxu0 %v310
    %v407 = vpop.f32.mrf.mxu0
    %v408 = vadd.f32 %v333, %v407
    %v409 = vpop.f32.mrf.mxu0
    %v410 = vadd.f32 %v333, %v409
    %411 = vmatmul.bf16.gmra.mxu0 %v311
    %v412 = vpop.f32.mrf.mxu0
    %v413 = vadd.f32 %v333, %v412
    %v414 = vpop.f32.mrf.mxu0
    %v415 = vadd.f32 %v333, %v414
    %416 = vmatmul.bf16.gmra.mxu0 %v312
    %v417 = vpop.f32.mrf.mxu0
    %v418 = vadd.f32 %v333, %v417
    %v419 = vpop.f32.mrf.mxu0
    %v420 = vadd.f32 %v333, %v419
    %421 = vmatmul.bf16.gmra.mxu0 %v313
    %v422 = vpop.f32.mrf.mxu0
    %v423 = vadd.f32 %v333, %v422
    %v424 = vpop.f32.mrf.mxu0
    %v425 = vadd.f32 %v333, %v424
    %426 = vmatmul.bf16.gmra.mxu0 %v314
    %v427 = vpop.f32.mrf.mxu0
    %v428 = vadd.f32 %v333, %v427
    %v429 = vpop.f32.mrf.mxu0
    %v430 = vadd.f32 %v333, %v429
    %431 = vdwg.mxu0
    %v432 = vmax.f32 %v393, 0.0
    %v433 = vmax.f32 %v395, 0.0
    %v434 = vmax.f32 %v398, 0.0
    %v435 = vmax.f32 %v400, 0.0
    %v436 = vmax.f32 %v403, 0.0
    %v437 = vmax.f32 %v405, 0.0
    %v438 = vmax.f32 %v408, 0.0
    %v439 = vmax.f32 %v410, 0.0
    %v440 = vmax.f32 %v413, 0.0
    %v441 = vmax.f32 %v415, 0.0
    %v442 = vmax.f32 %v418, 0.0
    %v443 = vmax.f32 %v420, 0.0
    %v444 = vmax.f32 %v423, 0.0
    %v445 = vmax.f32 %v425, 0.0
    %v446 = vmax.f32 %v428, 0.0
    %v447 = vmax.f32 %v430, 0.0
    %v448 = vpack.c.bf16 %v433, %v432
    %v449 = vpack.c.bf16 %v435, %v434
    %v450 = vpack.c.bf16 %v437, %v436
    %v451 = vpack.c.bf16 %v439, %v438
    %v452 = vpack.c.bf16 %v441, %v440
    %v453 = vpack.c.bf16 %v443, %v442
    %v454 = vpack.c.bf16 %v445, %v444
    %v455 = vpack.c.bf16 %v447, %v446
    %v456 = vld [vmem:[%s7] sm:$0xf]
    %v457 = vld [vmem:[%s7 + $0x4] sm:$0xf]
    %v458 = vld [vmem:[%s7 + $0x8] sm:$0xf]
    %v459 = vld [vmem:[%s7 + $0xc] sm:$0xf]
    %v460 = vld [vmem:[%s7 + $0x10] sm:$0xf]
    %v461 = vld [vmem:[%s7 + $0x14] sm:$0xf]
    %v462 = vld [vmem:[%s7 + $0x18] sm:$0xf]
    %v463 = vld [vmem:[%s7 + $0x1c] sm:$0xf]
    %v464 = vld [vmem:[%s8] sm:$0x1]
    %v466 = vperm.slane %v464, 0
    %v476 = vunpack.c.l.b16 %v456
    %v477 = vunpack.c.l.b16 %v457
    %v478 = vunpack.c.l.b16 %v458
    %v479 = vunpack.c.l.b16 %v459
    %v480 = vunpack.c.l.b16 %v460
    %v481 = vunpack.c.l.b16 %v461
    %v482 = vunpack.c.l.b16 %v462
    %v483 = vunpack.c.l.b16 %v463
    %v484 = vpack.c.b16 %v477, %v476
    %v485 = vpack.c.b16 %v479, %v478
    %v486 = vpack.c.b16 %v481, %v480
    %v487 = vpack.c.b16 %v483, %v482
    %vm492 = vcmask 523264
    %v494 = vsel %vm492, %v448, 0
    %v497 = vsel %vm492, %v449, 0
    %v500 = vsel %vm492, %v450, 0
    %v503 = vsel %vm492, %v451, 0
    %v506 = vsel %vm492, %v452, 0
    %v509 = vsel %vm492, %v453, 0
    %v512 = vsel %vm492, %v454, 0
    %v515 = vsel %vm492, %v455, 0
    %517 = vmatpush.bf16.msra.mxu0 0
    %518 = vmatpush.bf16.msra.mxu0 0
    %519 = vmatpush.bf16.msra.mxu0 0
    %520 = vmatpush.bf16.msra.mxu0 0
    %521 = vmatpush.bf16.msra.mxu0 %v487
    %522 = vmatpush.bf16.msra.mxu0 %v486
    %523 = vmatpush.bf16.msra.mxu0 %v485
    %524 = vmatpush.bf16.msra.mxu0 %v484
    %525 = vmatmul.bf16.gmra.mxu0 %v494
    %v526 = vpop.f32.mrf.mxu0
    %v527 = vadd.f32 %v466, %v526
    %v528 = vpop.f32.mrf.mxu0
    %v529 = vadd.f32 %v466, %v528
    %530 = vmatmul.bf16.gmra.mxu0 %v497
    %v531 = vpop.f32.mrf.mxu0
    %v532 = vadd.f32 %v466, %v531
    %v533 = vpop.f32.mrf.mxu0
    %v534 = vadd.f32 %v466, %v533
    %535 = vmatmul.bf16.gmra.mxu0 %v500
    %v536 = vpop.f32.mrf.mxu0
    %v537 = vadd.f32 %v466, %v536
    %v538 = vpop.f32.mrf.mxu0
    %v539 = vadd.f32 %v466, %v538
    %540 = vmatmul.bf16.gmra.mxu0 %v503
    %v541 = vpop.f32.mrf.mxu0
    %v542 = vadd.f32 %v466, %v541
    %v543 = vpop.f32.mrf.mxu0
    %v544 = vadd.f32 %v466, %v543
    %545 = vmatmul.bf16.gmra.mxu0 %v506
    %v546 = vpop.f32.mrf.mxu0
    %v547 = vadd.f32 %v466, %v546
    %v548 = vpop.f32.mrf.mxu0
    %v549 = vadd.f32 %v466, %v548
    %550 = vmatmul.bf16.gmra.mxu0 %v509
    %v551 = vpop.f32.mrf.mxu0
    %v552 = vadd.f32 %v466, %v551
    %v553 = vpop.f32.mrf.mxu0
    %v554 = vadd.f32 %v466, %v553
    %555 = vmatmul.bf16.gmra.mxu0 %v512
    %v556 = vpop.f32.mrf.mxu0
    %v557 = vadd.f32 %v466, %v556
    %v558 = vpop.f32.mrf.mxu0
    %v559 = vadd.f32 %v466, %v558
    %560 = vmatmul.bf16.gmra.mxu0 %v515
    %v561 = vpop.f32.mrf.mxu0
    %v562 = vadd.f32 %v466, %v561
    %v563 = vpop.f32.mrf.mxu0
    %v564 = vadd.f32 %v466, %v563
    %565 = vdwg.mxu0
    %v566 = vmax.f32 %v527, 0.0
    %v567 = vmax.f32 %v529, 0.0
    %v568 = vmax.f32 %v532, 0.0
    %v569 = vmax.f32 %v534, 0.0
    %v570 = vmax.f32 %v537, 0.0
    %v571 = vmax.f32 %v539, 0.0
    %v572 = vmax.f32 %v542, 0.0
    %v573 = vmax.f32 %v544, 0.0
    %v574 = vmax.f32 %v547, 0.0
    %v575 = vmax.f32 %v549, 0.0
    %v576 = vmax.f32 %v552, 0.0
    %v577 = vmax.f32 %v554, 0.0
    %v578 = vmax.f32 %v557, 0.0
    %v579 = vmax.f32 %v559, 0.0
    %v580 = vmax.f32 %v562, 0.0
    %v581 = vmax.f32 %v564, 0.0
    %v582 = vpack.c.bf16 %v567, %v566
    %v583 = vpack.c.bf16 %v569, %v568
    %v584 = vpack.c.bf16 %v571, %v570
    %v585 = vpack.c.bf16 %v573, %v572
    %v586 = vpack.c.bf16 %v575, %v574
    %v587 = vpack.c.bf16 %v577, %v576
    %v588 = vpack.c.bf16 %v579, %v578
    %v589 = vpack.c.bf16 %v581, %v580
    %v590 = vld [vmem:[%s9] sm:$0xf]
    %v591 = vld [vmem:[%s9 + $0x4] sm:$0xf]
    %v592 = vld [vmem:[%s9 + $0x8] sm:$0xf]
    %v593 = vld [vmem:[%s9 + $0xc] sm:$0xf]
    %v594 = vld [vmem:[%s10] sm:$0x1]
    %v596 = vperm.slane %v594, 0
    %v602 = vunpack.c.l.b16 %v590
    %v603 = vunpack.c.l.b16 %v591
    %v604 = vunpack.c.l.b16 %v592
    %v605 = vunpack.c.l.b16 %v593
    %v606 = vpack.c.b16 %v603, %v602
    %v607 = vpack.c.b16 %v605, %v604
    %vm610 = vcmask 261120
    %v612 = vsel %vm610, %v582, 0
    %v615 = vsel %vm610, %v583, 0
    %v618 = vsel %vm610, %v584, 0
    %v621 = vsel %vm610, %v585, 0
    %v624 = vsel %vm610, %v586, 0
    %v627 = vsel %vm610, %v587, 0
    %v630 = vsel %vm610, %v588, 0
    %v633 = vsel %vm610, %v589, 0
    %635 = vmatpush.bf16.msra.mxu0 0
    %636 = vmatpush.bf16.msra.mxu0 0
    %637 = vmatpush.bf16.msra.mxu0 0
    %638 = vmatpush.bf16.msra.mxu0 0
    %639 = vmatpush.bf16.msra.mxu0 0
    %640 = vmatpush.bf16.msra.mxu0 0
    %641 = vmatpush.bf16.msra.mxu0 %v607
    %642 = vmatpush.bf16.msra.mxu0 %v606
    %643 = vmatmul.bf16.gmra.mxu0 %v612
    %v644 = vpop.f32.mrf.mxu0
    %v645 = vadd.f32 %v596, %v644
    %v646 = vpop.f32.mrf.mxu0
    %v647 = vadd.f32 %v596, %v646
    %648 = vmatmul.bf16.gmra.mxu0 %v615
    %v649 = vpop.f32.mrf.mxu0
    %v650 = vadd.f32 %v596, %v649
    %v651 = vpop.f32.mrf.mxu0
    %v652 = vadd.f32 %v596, %v651
    %653 = vmatmul.bf16.gmra.mxu0 %v618
    %v654 = vpop.f32.mrf.mxu0
    %v655 = vadd.f32 %v596, %v654
    %v656 = vpop.f32.mrf.mxu0
    %v657 = vadd.f32 %v596, %v656
    %658 = vmatmul.bf16.gmra.mxu0 %v621
    %v659 = vpop.f32.mrf.mxu0
    %v660 = vadd.f32 %v596, %v659
    %v661 = vpop.f32.mrf.mxu0
    %v662 = vadd.f32 %v596, %v661
    %663 = vmatmul.bf16.gmra.mxu0 %v624
    %v664 = vpop.f32.mrf.mxu0
    %v665 = vadd.f32 %v596, %v664
    %v666 = vpop.f32.mrf.mxu0
    %v667 = vadd.f32 %v596, %v666
    %668 = vmatmul.bf16.gmra.mxu0 %v627
    %v669 = vpop.f32.mrf.mxu0
    %v670 = vadd.f32 %v596, %v669
    %v671 = vpop.f32.mrf.mxu0
    %v672 = vadd.f32 %v596, %v671
    %673 = vmatmul.bf16.gmra.mxu0 %v630
    %v674 = vpop.f32.mrf.mxu0
    %v675 = vadd.f32 %v596, %v674
    %v676 = vpop.f32.mrf.mxu0
    %v677 = vadd.f32 %v596, %v676
    %678 = vmatmul.bf16.gmra.mxu0 %v633
    %v679 = vpop.f32.mrf.mxu0
    %v680 = vadd.f32 %v596, %v679
    %v681 = vpop.f32.mrf.mxu0
    %v682 = vadd.f32 %v596, %v681
    %683 = vdwg.mxu0
    %684 = vmax.xlane.f32.xlu0 %v645
    %v685 = vpop.xlane.xlu0 %684
    %686 = vmax.xlane.f32.xlu0 %v647
    %v687 = vpop.xlane.xlu0 %686
    %688 = vmax.xlane.f32.xlu0 %v650
    %v689 = vpop.xlane.xlu0 %688
    %690 = vmax.xlane.f32.xlu0 %v652
    %v691 = vpop.xlane.xlu0 %690
    %692 = vmax.xlane.f32.xlu0 %v655
    %v693 = vpop.xlane.xlu0 %692
    %694 = vmax.xlane.f32.xlu0 %v657
    %v695 = vpop.xlane.xlu0 %694
    %696 = vmax.xlane.f32.xlu0 %v660
    %v697 = vpop.xlane.xlu0 %696
    %698 = vmax.xlane.f32.xlu0 %v662
    %v699 = vpop.xlane.xlu0 %698
    %700 = vmax.xlane.f32.xlu0 %v665
    %v701 = vpop.xlane.xlu0 %700
    %702 = vmax.xlane.f32.xlu0 %v667
    %v703 = vpop.xlane.xlu0 %702
    %704 = vmax.xlane.f32.xlu0 %v670
    %v705 = vpop.xlane.xlu0 %704
    %706 = vmax.xlane.f32.xlu0 %v672
    %v707 = vpop.xlane.xlu0 %706
    %708 = vmax.xlane.f32.xlu0 %v675
    %v709 = vpop.xlane.xlu0 %708
    %710 = vmax.xlane.f32.xlu0 %v677
    %v711 = vpop.xlane.xlu0 %710
    %712 = vmax.xlane.f32.xlu0 %v680
    %v713 = vpop.xlane.xlu0 %712
    %714 = vmax.xlane.f32.xlu0 %v682
    %v715 = vpop.xlane.xlu0 %714
    %v716 = vsub.f32 %v645, %v685
    %v717 = vsub.f32 %v647, %v687
    %v718 = vsub.f32 %v650, %v689
    %v719 = vsub.f32 %v652, %v691
    %v720 = vsub.f32 %v655, %v693
    %v721 = vsub.f32 %v657, %v695
    %v722 = vsub.f32 %v660, %v697
    %v723 = vsub.f32 %v662, %v699
    %v724 = vsub.f32 %v665, %v701
    %v725 = vsub.f32 %v667, %v703
    %v726 = vsub.f32 %v670, %v705
    %v727 = vsub.f32 %v672, %v707
    %v728 = vsub.f32 %v675, %v709
    %v729 = vsub.f32 %v677, %v711
    %v730 = vsub.f32 %v680, %v713
    %v731 = vsub.f32 %v682, %v715
    %v732 = vmul.f32 %v716, 1.442695
    %v733 = vpow.pop %v732
    %v734 = vmul.f32 %v717, 1.442695
    %v735 = vpow.pop %v734
    %v736 = vmul.f32 %v718, 1.442695
    %v737 = vpow.pop %v736
    %v738 = vmul.f32 %v719, 1.442695
    %v739 = vpow.pop %v738
    %v740 = vmul.f32 %v720, 1.442695
    %v741 = vpow.pop %v740
    %v742 = vmul.f32 %v721, 1.442695
    %v743 = vpow.pop %v742
    %v744 = vmul.f32 %v722, 1.442695
    %v745 = vpow.pop %v744
    %v746 = vmul.f32 %v723, 1.442695
    %v747 = vpow.pop %v746
    %v748 = vmul.f32 %v724, 1.442695
    %v749 = vpow.pop %v748
    %v750 = vmul.f32 %v725, 1.442695
    %v751 = vpow.pop %v750
    %v752 = vmul.f32 %v726, 1.442695
    %v753 = vpow.pop %v752
    %v754 = vmul.f32 %v727, 1.442695
    %v755 = vpow.pop %v754
    %v756 = vmul.f32 %v728, 1.442695
    %v757 = vpow.pop %v756
    %v758 = vmul.f32 %v729, 1.442695
    %v759 = vpow.pop %v758
    %v760 = vmul.f32 %v730, 1.442695
    %v761 = vpow.pop %v760
    %v762 = vmul.f32 %v731, 1.442695
    %v763 = vpow.pop %v762
    %764 = vadd.xlane.f32.xlu0 %v733
    %v765 = vpop.xlane.xlu0 %764
    %766 = vadd.xlane.f32.xlu0 %v735
    %v767 = vpop.xlane.xlu0 %766
    %768 = vadd.xlane.f32.xlu0 %v737
    %v769 = vpop.xlane.xlu0 %768
    %770 = vadd.xlane.f32.xlu0 %v739
    %v771 = vpop.xlane.xlu0 %770
    %772 = vadd.xlane.f32.xlu0 %v741
    %v773 = vpop.xlane.xlu0 %772
    %774 = vadd.xlane.f32.xlu0 %v743
    %v775 = vpop.xlane.xlu0 %774
    %776 = vadd.xlane.f32.xlu0 %v745
    %v777 = vpop.xlane.xlu0 %776
    %778 = vadd.xlane.f32.xlu0 %v747
    %v779 = vpop.xlane.xlu0 %778
    %780 = vadd.xlane.f32.xlu0 %v749
    %v781 = vpop.xlane.xlu0 %780
    %782 = vadd.xlane.f32.xlu0 %v751
    %v783 = vpop.xlane.xlu0 %782
    %784 = vadd.xlane.f32.xlu0 %v753
    %v785 = vpop.xlane.xlu0 %784
    %786 = vadd.xlane.f32.xlu0 %v755
    %v787 = vpop.xlane.xlu0 %786
    %788 = vadd.xlane.f32.xlu0 %v757
    %v789 = vpop.xlane.xlu0 %788
    %790 = vadd.xlane.f32.xlu0 %v759
    %v791 = vpop.xlane.xlu0 %790
    %792 = vadd.xlane.f32.xlu0 %v761
    %v793 = vpop.xlane.xlu0 %792
    %794 = vadd.xlane.f32.xlu0 %v763
    %v795 = vpop.xlane.xlu0 %794
    %v796 = vrcp.pop %v765
    %v797 = vrcp.pop %v767
    %v798 = vrcp.pop %v769
    %v799 = vrcp.pop %v771
    %v800 = vrcp.pop %v773
    %v801 = vrcp.pop %v775
    %v802 = vrcp.pop %v777
    %v803 = vrcp.pop %v779
    %v804 = vrcp.pop %v781
    %v805 = vrcp.pop %v783
    %v806 = vrcp.pop %v785
    %v807 = vrcp.pop %v787
    %v808 = vrcp.pop %v789
    %v809 = vrcp.pop %v791
    %v810 = vrcp.pop %v793
    %v811 = vrcp.pop %v795
    %v812 = vmul.f32 %v733, %v796
    %v813 = vmul.f32 %v735, %v797
    %v814 = vmul.f32 %v737, %v798
    %v815 = vmul.f32 %v739, %v799
    %v816 = vmul.f32 %v741, %v800
    %v817 = vmul.f32 %v743, %v801
    %v818 = vmul.f32 %v745, %v802
    %v819 = vmul.f32 %v747, %v803
    %v820 = vmul.f32 %v749, %v804
    %v821 = vmul.f32 %v751, %v805
    %v822 = vmul.f32 %v753, %v806
    %v823 = vmul.f32 %v755, %v807
    %v824 = vmul.f32 %v757, %v808
    %v825 = vmul.f32 %v759, %v809
    %v826 = vmul.f32 %v761, %v810
    %v827 = vmul.f32 %v763, %v811
    %v828 = vpack.c.bf16 %v812, %v812
    %v829 = vpack.c.bf16 %v813, %v813
    %v830 = vpack.c.bf16 %v814, %v814
    %v831 = vpack.c.bf16 %v815, %v815
    %v832 = vpack.c.bf16 %v816, %v816
    %v833 = vpack.c.bf16 %v817, %v817
    %v834 = vpack.c.bf16 %v818, %v818
    %v835 = vpack.c.bf16 %v819, %v819
    %v836 = vpack.c.bf16 %v820, %v820
    %v837 = vpack.c.bf16 %v821, %v821
    %v838 = vpack.c.bf16 %v822, %v822
    %v839 = vpack.c.bf16 %v823, %v823
    %v840 = vpack.c.bf16 %v824, %v824
    %v841 = vpack.c.bf16 %v825, %v825
    %v842 = vpack.c.bf16 %v826, %v826
    %v843 = vpack.c.bf16 %v827, %v827
    %844 = vst [vmem:[#allocation2] sm:$0xf] %v828
    %845 = vst [vmem:[#allocation2 + $0x4] sm:$0xf] %v829
    %846 = vst [vmem:[#allocation2 + $0x8] sm:$0xf] %v830
    %847 = vst [vmem:[#allocation2 + $0xc] sm:$0xf] %v831
    %848 = vst [vmem:[#allocation2 + $0x10] sm:$0xf] %v832
    %849 = vst [vmem:[#allocation2 + $0x14] sm:$0xf] %v833
    %850 = vst [vmem:[#allocation2 + $0x18] sm:$0xf] %v834
    %851 = vst [vmem:[#allocation2 + $0x1c] sm:$0xf] %v835
    %852 = vst [vmem:[#allocation2 + $0x20] sm:$0xf] %v836
    %853 = vst [vmem:[#allocation2 + $0x24] sm:$0xf] %v837
    %854 = vst [vmem:[#allocation2 + $0x28] sm:$0xf] %v838
    %855 = vst [vmem:[#allocation2 + $0x2c] sm:$0xf] %v839
    %856 = vst [vmem:[#allocation2 + $0x30] sm:$0xf] %v840
    %857 = vst [vmem:[#allocation2 + $0x34] sm:$0xf] %v841
    %858 = vst [vmem:[#allocation2 + $0x38] sm:$0xf] %v842
    %859 = vst [vmem:[#allocation2 + $0x3c] sm:$0xf] %v843
    // Predicated region
    $region46: #{tpu_custom_call.1} parent=1 // pred_check
      _
    $region47: #{tpu_custom_call.1} parent=1 // pred_check_branch
      %861 = sbr.rel (0) target = $region49
    $region48: #{tpu_custom_call.1} parent=1 // pred_region
      %863 = vsyncadd [#allocation3], 0
      %s864 = sshll.u32 [#allocation2], 4
      %s865 = int_to_ptr.vmem [resolvable:$true] %s864
      %s866 = sshll.u32 %s11, 4
      %s867 = int_to_ptr.hbm [resolvable:$true] %s866
      %872 = dma.vmem_to_hbm [thread:$0]  %s865, 1024, %s867, [#allocation3], 64, 64, 4
    $region49: #{tpu_custom_call.1} parent=1 // pred_fallthru
      _
    // Predicated region
    $region50: #{tpu_custom_call.1} parent=1 // pred_check
      _
    $region51: #{tpu_custom_call.1} parent=1 // pred_check_branch
      %874 = sbr.rel (0) target = $region53
    $region52: #{tpu_custom_call.1} parent=1 // pred_region
      %876 = dma.done [#allocation3], 1024
    $region53: #{tpu_custom_call.1} parent=1 // pred_fallthru
      _
    %877 = vsyncpa [#allocation3], 1

</llo_original>
